<compile_context>
chip_gen: v5e
topology: v5e:2x2
jax: 0.10.0
libtpu: 0.0.40
codegen_flags: <defaults>
</compile_context>

<pallas_src>
import math

import jax
import jax.numpy as jnp
from jax import lax
from jax.experimental import pallas as pl
from jax.experimental.pallas import tpu as pltpu

OUT_DIM = 9 * 2          # 18 real outputs: 9 means + 9 log-vars
N_PAD = 128              # lane-dense padded output width
MAX_BATCH_TILE = 512     # batch tile size cap (multiple of 8)


def _lattice_kernel(x_ref, w_ref, b_ref, out_ref):
    # x_ref:   (TB, d_model)   first-token hidden states tile
    # w_ref:   (d_model, 128)  zero-padded weight (columns 18..127 are zero)
    # b_ref:   (1, 128)        zero-padded bias
    # out_ref: (TB, 128)
    y = jnp.dot(x_ref[...], w_ref[...], preferred_element_type=jnp.float32)
    y = y + b_ref[...]

    # torch.nan_to_num(nan=0.0, posinf=1e6, neginf=-1e6) — exact semantics, pure selects.
    y = jnp.where(jnp.isnan(y), jnp.float32(0.0), y)
    y = jnp.where(jnp.isinf(y),
                  jnp.where(y > 0, jnp.float32(1000000.0), jnp.float32(-1000000.0)),
                  y)

    # Clamp only the log-var half (real columns 9..17) to [-20, 2]. Padding columns
    # (>= 18) are exactly zero, so clamping them is a no-op; they are sliced off in
    # the wrapper anyway.
    cols = lax.broadcasted_iota(jnp.int32, y.shape, dimension=1)
    y = jnp.where(cols >= 9, jnp.clip(y, -20.0, 2.0), y)

    out_ref[...] = y.astype(out_ref.dtype)


def lattice_decoder_forward(hidden_states, weight, bias, *, batch_tile=None):
    """hidden_states: (B, S, d_model). weight: (d_model, 18). bias: (18,).

    Returns dict with lattice_matrix_mean (B, 9) and lattice_matrix_log_var (B, 9).
    """
    B, S, d_model = hidden_states.shape

    # Module semantics: if seq_len > 1 use only token 0, then squeeze. Done here as a
    # cheap strided slice so the kernel never sees the other S-1 tokens.
    x = hidden_states[:, 0, :]  # (B, d_model)

    # Pad the N dimension to a full 128-lane vreg (lane-dense MXU result + unmasked store).
    w_pad = jnp.zeros((d_model, N_PAD), weight.dtype).at[:, :OUT_DIM].set(weight)
    b_pad = jnp.zeros((1, N_PAD), bias.dtype).at[:, :OUT_DIM].set(bias.reshape(1, OUT_DIM))

    tb = batch_tile if batch_tile is not None else min(B, MAX_BATCH_TILE)
    grid = (pl.cdiv(B, tb),)

    y = pl.pallas_call(
        _lattice_kernel,
        out_shape=jax.ShapeDtypeStruct((B, N_PAD), jnp.float32),
        grid=grid,
        in_specs=[
            pl.BlockSpec((tb, d_model), lambda i: (i, 0)),
            pl.BlockSpec((d_model, N_PAD), lambda i: (0, 0)),
            pl.BlockSpec((1, N_PAD), lambda i: (0, 0)),
        ],
        out_specs=pl.BlockSpec((tb, N_PAD), lambda i: (i, 0)),
        compiler_params=pltpu.CompilerParams(
            dimension_semantics=("parallel",)),
    )(x, w_pad, b_pad)

    # Slice the lane-padded (B, 128) result back into the two (B, 9) module outputs.
    return {
        "lattice_matrix_mean": y[:, :9],
        "lattice_matrix_log_var": y[:, 9:OUT_DIM],
    }


def init_params(key, d_model):
    # nn.Linear(d_model, 18) with xavier_normal_(gain=0.5) on weight, zeros bias.
    # PyTorch weight is (out, in); we store the transpose (in, out) for x @ W.
    fan_in, fan_out = d_model, OUT_DIM
    std = 0.5 * math.sqrt(2.0 / (fan_in + fan_out))
    w = std * jax.random.normal(key, (d_model, OUT_DIM), dtype=jnp.float32)
    b = jnp.zeros((OUT_DIM,), dtype=jnp.float32)
    return w, b


if __name__ == "__main__":
    key = jax.random.PRNGKey(0)
    k_w, k_x = jax.random.split(key)

    B, S, d_model = 2, 8, 32
    weight, bias = init_params(k_w, d_model)
    # Scale inputs so some log-var outputs fall outside [-20, 2] (exercises the clamp),
    # and inject a NaN into token 0 of batch 1 (exercises nan_to_num).
    hidden_states = 100.0 * jax.random.normal(k_x, (B, S, d_model), dtype=jnp.float32)
    hidden_states = hidden_states.at[1, 0, 0].set(jnp.nan)

    out = lattice_decoder_forward(hidden_states, weight, bias)
    jax.block_until_ready(out)

    # Pure-JAX reference check.
    x = hidden_states[:, 0, :]
    y = x @ weight + bias
    y = jnp.nan_to_num(y, nan=0.0, posinf=1000000.0, neginf=-1000000.0)
    ref_mean = y[:, :9]
    ref_logvar = jnp.clip(y[:, 9:], -20.0, 2.0)

    assert out["lattice_matrix_mean"].shape == (B, 9)
    assert out["lattice_matrix_log_var"].shape == (B, 9)
    assert jnp.allclose(out["lattice_matrix_mean"], ref_mean, atol=1e-3, rtol=1e-4)
    assert jnp.allclose(out["lattice_matrix_log_var"], ref_logvar, atol=1e-3, rtol=1e-4)

    print("KERNEL_OK")
</pallas_src>

<mosaic_0001>
module attributes {stable_mosaic.version = 11 : i64} {
  func.func @_lattice_kernel(%arg0: i32, %arg1: memref<2x32xf32, #tpu.memory_space<vmem>>, %arg2: memref<32x128xf32, #tpu.memory_space<vmem>>, %arg3: memref<1x128xf32, #tpu.memory_space<vmem>>, %arg4: memref<2x128xf32, #tpu.memory_space<vmem>>) attributes {dimension_semantics = [#tpu.dimension_semantics<parallel>], iteration_bounds = array<i64: 1>, scalar_prefetch = 0 : i64, scratch_operands = 0 : i64, tpu.core_type = #tpu.core_type<tc>, window_params = [{transform_indices = @transform_0, window_bounds = array<i64: 2, 32>}, {pipeline_mode = #tpu.pipeline_mode<synchronous>, transform_indices = @transform_1, window_bounds = array<i64: 32, 128>}, {pipeline_mode = #tpu.pipeline_mode<synchronous>, transform_indices = @transform_2, window_bounds = array<i64: 1, 128>}, {transform_indices = @transform_3, window_bounds = array<i64: 2, 128>}]} {
    %c0 = arith.constant 0 : index
    %c0_0 = arith.constant 0 : index
    %0 = vector.load %arg1[%c0, %c0_0] : memref<2x32xf32, #tpu.memory_space<vmem>>, vector<2x32xf32>
    %c0_1 = arith.constant 0 : index
    %c0_2 = arith.constant 0 : index
    %1 = vector.load %arg2[%c0_1, %c0_2] : memref<32x128xf32, #tpu.memory_space<vmem>>, vector<32x128xf32>
    %cst = arith.constant dense<0.000000e+00> : vector<2x128xf32>
    %2 = tpu.matmul %0, %1, %cst {dimension_numbers = #tpu.dot_dimension_numbers<[1], [0], [0], [1], [0, 0, 1, 1], [], []>} : vector<2x32xf32>, vector<32x128xf32>, vector<2x128xf32> -> vector<2x128xf32>
    %c0_3 = arith.constant 0 : index
    %c0_4 = arith.constant 0 : index
    %3 = vector.load %arg3[%c0_3, %c0_4] : memref<1x128xf32, #tpu.memory_space<vmem>>, vector<1x128xf32>
    %4 = vector.broadcast %3 : vector<1x128xf32> to vector<2x128xf32>
    %5 = arith.addf %2, %4 : vector<2x128xf32>
    %6 = arith.cmpf one, %5, %5 : vector<2x128xf32>
    %cst_5 = arith.constant 0.000000e+00 : f32
    %7 = vector.broadcast %cst_5 : f32 to vector<2x128xf32>
    %8 = arith.select %6, %7, %5 : vector<2x128xi1>, vector<2x128xf32>
    %9 = math.absf %8 : vector<2x128xf32>
    %cst_6 = arith.constant 0x7F800000 : f32
    %10 = vector.broadcast %cst_6 : f32 to vector<2x128xf32>
    %11 = arith.cmpf oeq, %9, %10 : vector<2x128xf32>
    %cst_7 = arith.constant 0.000000e+00 : f32
    %12 = vector.broadcast %cst_7 : f32 to vector<2x128xf32>
    %13 = arith.cmpf ogt, %8, %12 : vector<2x128xf32>
    %cst_8 = arith.constant 1.000000e+06 : f32
    %cst_9 = arith.constant -1.000000e+06 : f32
    %14 = vector.broadcast %cst_8 : f32 to vector<2x128xf32>
    %15 = vector.broadcast %cst_9 : f32 to vector<2x128xf32>
    %16 = arith.select %13, %14, %15 : vector<2x128xi1>, vector<2x128xf32>
    %17 = arith.select %11, %16, %8 : vector<2x128xi1>, vector<2x128xf32>
    %18 = tpu.iota {dimensions = array<i32: 1>} : vector<2x128xi32>
    %c9_i32 = arith.constant 9 : i32
    %19 = vector.broadcast %c9_i32 : i32 to vector<2x128xi32>
    %20 = arith.cmpi sge, %18, %19 : vector<2x128xi32>
    %cst_10 = arith.constant -2.000000e+01 : f32
    %cst_11 = arith.constant 2.000000e+00 : f32
    %21 = vector.broadcast %cst_10 : f32 to vector<2x128xf32>
    %22 = arith.maximumf %21, %17 : vector<2x128xf32>
    %23 = vector.broadcast %cst_11 : f32 to vector<2x128xf32>
    %24 = arith.minimumf %23, %22 : vector<2x128xf32>
    %25 = arith.select %20, %24, %17 : vector<2x128xi1>, vector<2x128xf32>
    %c0_12 = arith.constant 0 : index
    %c0_13 = arith.constant 0 : index
    %26 = vector.load %arg4[%c0_12, %c0_13] : memref<2x128xf32, #tpu.memory_space<vmem>>, vector<2x128xf32>
    tpu.vector_store %arg4[%c0_12, %c0_13], %25 {strides = array<i32>} : memref<2x128xf32, #tpu.memory_space<vmem>>, vector<2x128xf32>,
    return
  }
  func.func @transform_0(%arg0: i32) -> (i32, i32) {
    %c0_i32 = arith.constant 0 : i32
    %c0_i32_0 = arith.constant 0 : i32
    return %arg0, %c0_i32 : i32, i32
  }
  func.func @transform_1(%arg0: i32) -> (i32, i32) {
    %c0_i32 = arith.constant 0 : i32
    %c0_i32_0 = arith.constant 0 : i32
    %c0_i32_1 = arith.constant 0 : i32
    return %c0_i32, %c0_i32_0 : i32, i32
  }
  func.func @transform_2(%arg0: i32) -> (i32, i32) {
    %c0_i32 = arith.constant 0 : i32
    %c0_i32_0 = arith.constant 0 : i32
    %c0_i32_1 = arith.constant 0 : i32
    return %c0_i32, %c0_i32_0 : i32, i32
  }
  func.func @transform_3(%arg0: i32) -> (i32, i32) {
    %c0_i32 = arith.constant 0 : i32
    %c0_i32_0 = arith.constant 0 : i32
    return %arg0, %c0_i32 : i32, i32
  }
}

</mosaic_0001>

<llo_original>
// kernel: tpu_custom_call.1
$region0: #{tpu_custom_call.1}
  #allocation0 [shape = 'u32[]', space=smem, size = 0x4, offset = 0x4, fixed_abs, tag = 'smem constant byte address 0x4 - core index']
  #allocation1 [shape = 'u32[72,128]{1,0:T(1,128)}', space=vmem, size = 0x9000, scoped, tag = 'internal scratch']
  %s0 = inlined_call_operand.hbm [shape: f32[2,32], index: 0, kind: input, shape index: {}]
  %s1 = inlined_call_operand.hbm [shape: f32[32,128], index: 1, kind: input, shape index: {}]
  %s2 = inlined_call_operand.vmem [shape: f32[1,128], index: 2, kind: input, shape index: {}]
  %s3 = inlined_call_operand.hbm [shape: f32[2,128], index: 3, kind: output, shape index: {}]
  %s4 = sld [smem:[#allocation0]]
  $region30: #{tpu_custom_call.1} parent=0
    _
  %s6 = ssub.s32 1, %s4
  %s7 = scalar_select 0, %s6, %s4
  $region1: #{tpu_custom_call.1} parent=0
    #allocation2 [shape = 'u8[1024]{0}', space=vmem, size = 0x400, scoped, tag = 'input window, operand 0, single buffered']
    #allocation3 [shape = 's32[1]{0}', space=sflag, size = 0x4, scoped, tag = 'scoped memory for tpu_custom_call.1']
    #allocation4 [shape = 's32[1]{0}', space=sflag, size = 0x4, scoped, tag = 'scoped memory for tpu_custom_call.1']
    #allocation5 [shape = 'u8[16384]{0}', space=vmem, size = 0x4000, scoped, tag = 'input window, operand 1, single buffered']
    #allocation6 [shape = 's32[1]{0}', space=sflag, size = 0x4, scoped, tag = 'scoped memory for tpu_custom_call.1']
    #allocation7 [shape = 'u8[1024]{0}', space=vmem, size = 0x400, scoped, tag = 'output window, operand 0, single buffered']
    %8 = vsyncpa [#allocation3], 0
    %9 = vsyncpa [#allocation6], 0
    %10 = vsyncpa [#allocation4], 0
    // Predicated region
    $region2: #{tpu_custom_call.1} parent=1 // pred_check
      _
    $region3: #{tpu_custom_call.1} parent=1 // pred_check_branch
      %12 = sbr.rel (0) target = $region5
    $region4: #{tpu_custom_call.1} parent=1 // pred_region
      %14 = vsyncadd [#allocation3], 0
      %s16 = sshll.u32 %s0, 4
      %s17 = int_to_ptr.hbm [resolvable:$true] %s16
      %s18 = sshll.u32 [#allocation2], 4
      %s19 = int_to_ptr.vmem [resolvable:$true] %s18
      %21 = dma.hbm_to_vmem [thread:$0]  %s17, 32, %s19, [#allocation3]
    $region5: #{tpu_custom_call.1} parent=1 // pred_fallthru
      _
    // Predicated region
    $region6: #{tpu_custom_call.1} parent=1 // pred_check
      _
    $region7: #{tpu_custom_call.1} parent=1 // pred_check_branch
      %23 = sbr.rel (0) target = $region9
    $region8: #{tpu_custom_call.1} parent=1 // pred_region
      %25 = vsyncadd [#allocation6], 0
      %s26 = sshll.u32 %s1, 4
      %s27 = int_to_ptr.hbm [resolvable:$true] %s26
      %s28 = sshll.u32 [#allocation5], 4
      %s29 = int_to_ptr.vmem [resolvable:$true] %s28
      %34 = dma.hbm_to_vmem [thread:$0]  %s27, 512, %s29, [#allocation6], 128, 128, 8
    $region9: #{tpu_custom_call.1} parent=1 // pred_fallthru
      _
    // Predicated region
    $region10: #{tpu_custom_call.1} parent=1 // pred_check
      _
    $region11: #{tpu_custom_call.1} parent=1 // pred_check_branch
      %36 = sbr.rel (0) target = $region13
    $region12: #{tpu_custom_call.1} parent=1 // pred_region
      _
    $region13: #{tpu_custom_call.1} parent=1 // pred_fallthru
      _
    // Predicated region
    $region14: #{tpu_custom_call.1} parent=1 // pred_check
      _
    $region15: #{tpu_custom_call.1} parent=1 // pred_check_branch
      %38 = sbr.rel (0) target = $region17
    $region16: #{tpu_custom_call.1} parent=1 // pred_region
      %40 = dma.done [#allocation3], 32
    $region17: #{tpu_custom_call.1} parent=1 // pred_fallthru
      _
    // Predicated region
    $region18: #{tpu_custom_call.1} parent=1 // pred_check
      _
    $region19: #{tpu_custom_call.1} parent=1 // pred_check_branch
      %42 = sbr.rel (0) target = $region21
    $region20: #{tpu_custom_call.1} parent=1 // pred_region
      %44 = dma.done [#allocation6], 512
    $region21: #{tpu_custom_call.1} parent=1 // pred_fallthru
      _
    %v45 = vld [vmem:[#allocation2] sm:$0x3]
    %v46 = vld [vmem:[#allocation5] sm:$0xff]
    %v47 = vld [vmem:[#allocation5 + $0x8] sm:$0xff]
    %v48 = vld [vmem:[#allocation5 + $0x10] sm:$0xff]
    %v49 = vld [vmem:[#allocation5 + $0x18] sm:$0xff]
    %v50 = vld [vmem:[%s2] sm:$0x1]
    %v52 = vperm.slane %v50, 0
    %vm54 = vcmask 261120
    %v56 = vsel %vm54, %v45, 0
    %58 = vmatpush.msra.mxu0 0.0
    %59 = vmatpush.msra.mxu0 0.0
    %60 = vmatpush.msra.mxu0 0.0
    %61 = vmatpush.msra.mxu0 0.0
    %62 = vmatpush.msra.mxu0 0.0
    %63 = vmatpush.msra.mxu0 0.0
    %64 = vmatpush.msra.mxu0 0.0
    %65 = vmatpush.msra.mxu0 0.0
    %66 = vmatpush.msra.mxu0 0.0
    %67 = vmatpush.msra.mxu0 0.0
    %68 = vmatpush.msra.mxu0 0.0
    %69 = vmatpush.msra.mxu0 0.0
    %70 = vmatpush.msra.mxu0 %v49
    %71 = vmatpush.msra.mxu0 %v48
    %72 = vmatpush.msra.mxu0 %v47
    %73 = vmatpush.msra.mxu0 %v46
    %74 = vmatmul.f32.gmra.mxu0 %v56
    %v75 = vpop.f32.mrf.mxu0
    %v76 = vadd.f32 %v52, %v75
    %77 = vdwg.mxu0
    %vm78 = vcmp.ne.f32.partialorder %v76, %v76
    %v79 = vsel %vm78, 0.0, %v76
    %v80 = vand.u32 2147483647, %v79
    %vm81 = vcmp.eq.f32.partialorder %v80, inf
    %vm82 = vcmp.gt.f32.partialorder %v79, 0.0
    %v83 = vsel %vm82, 1000000.0, -1000000.0
    %v84 = vsel %vm81, %v83, %v79
    %v85 = vlaneseq
    %v86 = vand.u32 %v85, 127
    %vm87 = vcmp.ge.s32.totalorder %v86, 9
    %v88 = vmax.f32 %v84, -20.0
    %v89 = vmin.f32 %v88, 2.0
    %v90 = vsel %vm87, %v89, %v84
    %91 = vst [vmem:[#allocation7] sm:$0x3] %v90
    // Predicated region
    $region22: #{tpu_custom_call.1} parent=1 // pred_check
      _
    $region23: #{tpu_custom_call.1} parent=1 // pred_check_branch
      %93 = sbr.rel (0) target = $region25
    $region24: #{tpu_custom_call.1} parent=1 // pred_region
      %95 = vsyncadd [#allocation4], 0
      %s97 = sshll.u32 [#allocation7], 4
      %s98 = int_to_ptr.vmem [resolvable:$true] %s97
      %s99 = sshll.u32 %s3, 4
      %s100 = int_to_ptr.hbm [resolvable:$true] %s99
      %102 = dma.vmem_to_hbm [thread:$0]  %s98, 32, %s100, [#allocation4]
    $region25: #{tpu_custom_call.1} parent=1 // pred_fallthru
      _
    // Predicated region
    $region26: #{tpu_custom_call.1} parent=1 // pred_check
      _
    $region27: #{tpu_custom_call.1} parent=1 // pred_check_branch
      %104 = sbr.rel (0) target = $region29
    $region28: #{tpu_custom_call.1} parent=1 // pred_region
      %106 = dma.done [#allocation4], 32
    $region29: #{tpu_custom_call.1} parent=1 // pred_fallthru
      _
    %107 = vsyncpa [#allocation3], 1
    %108 = vsyncpa [#allocation6], 1
    %109 = vsyncpa [#allocation4], 1

</llo_original>
